<compile_context>
chip_gen: v7x
topology: tpu7x:2x2x1
jax: 0.10.0
libtpu: 0.0.40
codegen_flags: <defaults>
</compile_context>

<pallas_src>
import functools

import jax
import jax.numpy as jnp
from jax.experimental import pallas as pl
from jax.experimental.pallas import tpu as pltpu

EPS = 1e-6


def _round_up(n, m):
    return (n + m - 1) // m * m


def _sublayer_connection_kernel(x_ref, res_ref, g_ref, b_ref, w_ref, wb_ref,
                                o_ref, *, inv_c: float):
    """One (row-tile, N-tile) step: fused LayerNorm -> bf16 linear -> residual."""
    x = x_ref[0]                                          # (TM, Cp) f32
    # ---- LayerNorm over the (real) C lanes: single fused-stats pass ----
    s = jnp.sum(x, axis=-1, keepdims=True)                # zero-padded lanes add 0
    ss = jnp.sum(x * x, axis=-1, keepdims=True)
    mean = s * inv_c
    var = jnp.maximum(ss * inv_c - mean * mean, 0.0)      # biased variance
    inv = jax.lax.rsqrt(var + EPS)                        # EUP slot -> ~free
    # gamma/beta are zero in padded lanes, so ln is exactly 0 there.
    ln = ((x - mean) * inv * g_ref[0] + b_ref[0]).astype(jnp.bfloat16)
    # ---- sublayer: bf16 MXU matmul, f32 accumulation ----
    h = jnp.dot(ln, w_ref[...], preferred_element_type=jnp.float32) + wb_ref[0]
    # ---- dropout (eval mode => identity) + residual ----
    # res_ref block is (1, TM, TN) for flag=False and (1, 1, TN) for flag=True;
    # the (1, TN) -> (TM, TN) broadcast happens inside the add (no broadcast_to).
    o_ref[0] = res_ref[0] + h


def sublayer_connection_forward(x, gamma, beta, w, wb, *, flag=False):
    """x: (B, T, C) f32. Returns (B, T, C) f32."""
    B, T, C = x.shape

    if flag:
        # Residual is the per-batch mid row -> keep B as an explicit grid axis.
        x_view = x                                        # (B, T, C)
        res_view = x[:, T // 2:T // 2 + 1, :]             # (B, 1, C)
        b_eff, t_eff = B, T
    else:
        # LayerNorm/linear are per-row -> flatten (B, T) into one row axis so row
        # tiles can reach 256 rows even when T is small.
        x_view = x.reshape(1, B * T, C)
        res_view = x_view
        b_eff, t_eff = 1, B * T

    # Lane-dense padding: C -> multiple of 128; rows -> multiple of the row tile.
    cp = _round_up(C, 128)
    tm = min(256, _round_up(t_eff, 8))                    # up to 256 rows / step
    tp = _round_up(t_eff, tm)
    tn = next(t for t in (512, 256, 128) if cp % t == 0)  # weight N-tile

    xp = jnp.pad(x_view, ((0, 0), (0, tp - t_eff), (0, cp - C)))
    gp = jnp.pad(gamma, (0, cp - C)).reshape(1, cp)
    bp = jnp.pad(beta, (0, cp - C)).reshape(1, cp)
    wp = jnp.pad(w, ((0, cp - C), (0, cp - C))).astype(jnp.bfloat16)
    wbp = jnp.pad(wb, (0, cp - C)).reshape(1, cp)

    if flag:
        resp = jnp.pad(res_view, ((0, 0), (0, 0), (0, cp - C)))   # (B, 1, Cp)
        res_block = (1, 1, tn)
        res_map = lambda b, t, j: (b, 0, j)
    else:
        resp = xp                                                  # same array as x
        res_block = (1, tm, tn)
        res_map = lambda b, t, j: (b, t, j)

    grid = (b_eff, tp // tm, cp // tn)
    kernel = functools.partial(_sublayer_connection_kernel, inv_c=1.0 / C)

    out = pl.pallas_call(
        kernel,
        out_shape=jax.ShapeDtypeStruct((b_eff, tp, cp), jnp.float32),
        grid_spec=pltpu.PrefetchScalarGridSpec(
            num_scalar_prefetch=0,
            grid=grid,
            in_specs=[
                # x tile: full Cp (needed for the LN reduction and matmul K).
                pl.BlockSpec((1, tm, cp), lambda b, t, j: (b, t, 0)),
                # residual slab (lane-dense TN columns; per-batch mid row if flag).
                pl.BlockSpec(res_block, res_map),
                pl.BlockSpec((1, cp), lambda b, t, j: (0, 0)),     # gamma
                pl.BlockSpec((1, cp), lambda b, t, j: (0, 0)),     # beta
                pl.BlockSpec((cp, tn), lambda b, t, j: (0, j)),    # weight (bf16)
                pl.BlockSpec((1, tn), lambda b, t, j: (0, j)),     # bias
            ],
            out_specs=pl.BlockSpec((1, tm, tn), lambda b, t, j: (b, t, j)),
        ),
        compiler_params=pltpu.CompilerParams(
            dimension_semantics=("parallel", "parallel", "arbitrary"),
            vmem_limit_bytes=64 * 1024 * 1024),
    )(xp, resp, gp, bp, wp, wbp)

    out = out[:, :t_eff, :C]
    if not flag:
        out = out.reshape(B, T, C)
    return out


def _reference(x, gamma, beta, w, wb, *, flag=False):
    """Pure-JAX reference (bf16 matmul to mirror the kernel's MXU precision)."""
    B, T, C = x.shape
    mean = jnp.mean(x, axis=-1, keepdims=True)
    var = jnp.mean((x - mean) ** 2, axis=-1, keepdims=True)
    ln = (x - mean) * jax.lax.rsqrt(var + EPS) * gamma + beta
    h = jnp.einsum("btc,cd->btd", ln.astype(jnp.bfloat16), w.astype(jnp.bfloat16),
                   preferred_element_type=jnp.float32) + wb
    res = x[:, T // 2:T // 2 + 1] if flag else x
    return res + h


if __name__ == "__main__":
    B, T, C = 2, 8, 32
    key = jax.random.PRNGKey(0)
    kx, kg, kb, kw, kwb = jax.random.split(key, 5)

    x = jax.random.normal(kx, (B, T, C), dtype=jnp.float32)
    # Deterministic parameter init (synthetic, not loaded from a checkpoint).
    gamma = 1.0 + 0.02 * jax.random.normal(kg, (C,), dtype=jnp.float32)
    beta = 0.02 * jax.random.normal(kb, (C,), dtype=jnp.float32)
    w = jax.random.normal(kw, (C, C), dtype=jnp.float32) / jnp.sqrt(C)
    wb = 0.02 * jax.random.normal(kwb, (C,), dtype=jnp.float32)

    ok = True
    for flag in (False, True):
        out = jax.block_until_ready(
            sublayer_connection_forward(x, gamma, beta, w, wb, flag=flag))
        ref = _reference(x, gamma, beta, w, wb, flag=flag)
        if not jnp.allclose(out, ref, atol=2e-2, rtol=2e-2):
            ok = False

    if ok:
        print("KERNEL_OK")
</pallas_src>

<mosaic_0001>
module attributes {stable_mosaic.version = 11 : i64} {
  func.func @_sublayer_connection_kernel(%arg0: i32, %arg1: i32, %arg2: i32, %arg3: memref<1x16x128xf32, #tpu.memory_space<vmem>>, %arg4: memref<1x16x128xf32, #tpu.memory_space<vmem>>, %arg5: memref<1x128xf32, #tpu.memory_space<vmem>>, %arg6: memref<1x128xf32, #tpu.memory_space<vmem>>, %arg7: memref<128x128xbf16, #tpu.memory_space<vmem>>, %arg8: memref<1x128xf32, #tpu.memory_space<vmem>>, %arg9: memref<1x16x128xf32, #tpu.memory_space<vmem>>) attributes {dimension_semantics = [#tpu.dimension_semantics<parallel>, #tpu.dimension_semantics<parallel>, #tpu.dimension_semantics<arbitrary>], iteration_bounds = array<i64: 1, 1, 1>, scalar_prefetch = 0 : i64, scratch_operands = 0 : i64, tpu.core_type = #tpu.core_type<tc>, window_params = [{transform_indices = @transform_0, window_bounds = array<i64: 1, 16, 128>}, {transform_indices = @transform_1, window_bounds = array<i64: 1, 16, 128>}, {pipeline_mode = #tpu.pipeline_mode<synchronous>, transform_indices = @transform_2, window_bounds = array<i64: 1, 128>}, {pipeline_mode = #tpu.pipeline_mode<synchronous>, transform_indices = @transform_3, window_bounds = array<i64: 1, 128>}, {transform_indices = @transform_4, window_bounds = array<i64: 128, 128>}, {transform_indices = @transform_5, window_bounds = array<i64: 1, 128>}, {transform_indices = @transform_6, window_bounds = array<i64: 1, 16, 128>}]} {
    %c0 = arith.constant 0 : index
    %c0_0 = arith.constant 0 : index
    %c0_1 = arith.constant 0 : index
    %0 = vector.load %arg3[%c0, %c0_0, %c0_1] : memref<1x16x128xf32, #tpu.memory_space<vmem>>, vector<1x16x128xf32>
    %1 = vector.shape_cast %0 : vector<1x16x128xf32> to vector<16x128xf32>
    %cst = arith.constant dense<0.000000e+00> : vector<16xf32>
    %2 = vector.multi_reduction <add>, %1, %cst [1] : vector<16x128xf32> to vector<16xf32>
    %3 = vector.shape_cast %2 : vector<16xf32> to vector<16x1xf32>
    %4 = arith.mulf %1, %1 : vector<16x128xf32>
    %cst_2 = arith.constant dense<0.000000e+00> : vector<16xf32>
    %5 = vector.multi_reduction <add>, %4, %cst_2 [1] : vector<16x128xf32> to vector<16xf32>
    %6 = vector.shape_cast %5 : vector<16xf32> to vector<16x1xf32>
    %cst_3 = arith.constant 3.125000e-02 : f32
    %7 = vector.broadcast %cst_3 : f32 to vector<16x1xf32>
    %8 = arith.mulf %3, %7 : vector<16x1xf32>
    %cst_4 = arith.constant 3.125000e-02 : f32
    %9 = vector.broadcast %cst_4 : f32 to vector<16x1xf32>
    %10 = arith.mulf %6, %9 : vector<16x1xf32>
    %11 = arith.mulf %8, %8 : vector<16x1xf32>
    %12 = arith.subf %10, %11 : vector<16x1xf32>
    %cst_5 = arith.constant 0.000000e+00 : f32
    %13 = vector.broadcast %cst_5 : f32 to vector<16x1xf32>
    %14 = arith.maximumf %12, %13 : vector<16x1xf32>
    %cst_6 = arith.constant 9.99999997E-7 : f32
    %15 = vector.broadcast %cst_6 : f32 to vector<16x1xf32>
    %16 = arith.addf %14, %15 : vector<16x1xf32>
    %17 = math.rsqrt %16 : vector<16x1xf32>
    %18 = vector.broadcast %8 : vector<16x1xf32> to vector<16x128xf32>
    %19 = arith.subf %1, %18 : vector<16x128xf32>
    %20 = vector.broadcast %17 : vector<16x1xf32> to vector<16x128xf32>
    %21 = arith.mulf %19, %20 : vector<16x128xf32>
    %c0_7 = arith.constant 0 : index
    %c0_8 = arith.constant 0 : index
    %22 = vector.load %arg5[%c0_7, %c0_8] : memref<1x128xf32, #tpu.memory_space<vmem>>, vector<1x128xf32>
    %23 = vector.shape_cast %22 : vector<1x128xf32> to vector<128xf32>
    %24 = vector.shape_cast %23 : vector<128xf32> to vector<1x128xf32>
    %25 = vector.broadcast %24 : vector<1x128xf32> to vector<16x128xf32>
    %26 = arith.mulf %21, %25 : vector<16x128xf32>
    %c0_9 = arith.constant 0 : index
    %c0_10 = arith.constant 0 : index
    %27 = vector.load %arg6[%c0_9, %c0_10] : memref<1x128xf32, #tpu.memory_space<vmem>>, vector<1x128xf32>
    %28 = vector.shape_cast %27 : vector<1x128xf32> to vector<128xf32>
    %29 = vector.shape_cast %28 : vector<128xf32> to vector<1x128xf32>
    %30 = vector.broadcast %29 : vector<1x128xf32> to vector<16x128xf32>
    %31 = arith.addf %26, %30 : vector<16x128xf32>
    %32 = arith.truncf %31 : vector<16x128xf32> to vector<16x128xbf16>
    %c0_11 = arith.constant 0 : index
    %c0_12 = arith.constant 0 : index
    %33 = vector.load %arg7[%c0_11, %c0_12] : memref<128x128xbf16, #tpu.memory_space<vmem>>, vector<128x128xbf16>
    %cst_13 = arith.constant dense<0.000000e+00> : vector<16x128xf32>
    %34 = tpu.matmul %32, %33, %cst_13 {dimension_numbers = #tpu.dot_dimension_numbers<[1], [0], [0], [1], [0, 0, 1, 1], [], []>} : vector<16x128xbf16>, vector<128x128xbf16>, vector<16x128xf32> -> vector<16x128xf32>
    %c0_14 = arith.constant 0 : index
    %c0_15 = arith.constant 0 : index
    %35 = vector.load %arg8[%c0_14, %c0_15] : memref<1x128xf32, #tpu.memory_space<vmem>>, vector<1x128xf32>
    %36 = vector.shape_cast %35 : vector<1x128xf32> to vector<128xf32>
    %37 = vector.shape_cast %36 : vector<128xf32> to vector<1x128xf32>
    %38 = vector.broadcast %37 : vector<1x128xf32> to vector<16x128xf32>
    %39 = arith.addf %34, %38 : vector<16x128xf32>
    %c0_16 = arith.constant 0 : index
    %c0_17 = arith.constant 0 : index
    %c0_18 = arith.constant 0 : index
    %40 = vector.load %arg4[%c0_16, %c0_17, %c0_18] : memref<1x16x128xf32, #tpu.memory_space<vmem>>, vector<1x16x128xf32>
    %41 = vector.shape_cast %40 : vector<1x16x128xf32> to vector<16x128xf32>
    %42 = arith.addf %41, %39 : vector<16x128xf32>
    %c0_19 = arith.constant 0 : index
    %c0_20 = arith.constant 0 : index
    %c0_21 = arith.constant 0 : index
    %43 = vector.load %arg9[%c0_19, %c0_20, %c0_21] : memref<1x16x128xf32, #tpu.memory_space<vmem>>, vector<1x16x128xf32>
    %44 = vector.shape_cast %43 : vector<1x16x128xf32> to vector<16x128xf32>
    %45 = vector.shape_cast %42 : vector<16x128xf32> to vector<1x16x128xf32>
    tpu.vector_store %arg9[%c0_19, %c0_20, %c0_21], %45 {strides = array<i32>} : memref<1x16x128xf32, #tpu.memory_space<vmem>>, vector<1x16x128xf32>,
    return
  }
  func.func @transform_0(%arg0: i32, %arg1: i32, %arg2: i32) -> (i32, i32, i32) {
    %c0_i32 = arith.constant 0 : i32
    %c0_i32_0 = arith.constant 0 : i32
    return %arg0, %arg1, %c0_i32 : i32, i32, i32
  }
  func.func @transform_1(%arg0: i32, %arg1: i32, %arg2: i32) -> (i32, i32, i32) {
    %c0_i32 = arith.constant 0 : i32
    return %arg0, %arg1, %arg2 : i32, i32, i32
  }
  func.func @transform_2(%arg0: i32, %arg1: i32, %arg2: i32) -> (i32, i32) {
    %c0_i32 = arith.constant 0 : i32
    %c0_i32_0 = arith.constant 0 : i32
    %c0_i32_1 = arith.constant 0 : i32
    return %c0_i32, %c0_i32_0 : i32, i32
  }
  func.func @transform_3(%arg0: i32, %arg1: i32, %arg2: i32) -> (i32, i32) {
    %c0_i32 = arith.constant 0 : i32
    %c0_i32_0 = arith.constant 0 : i32
    %c0_i32_1 = arith.constant 0 : i32
    return %c0_i32, %c0_i32_0 : i32, i32
  }
  func.func @transform_4(%arg0: i32, %arg1: i32, %arg2: i32) -> (i32, i32) {
    %c0_i32 = arith.constant 0 : i32
    %c0_i32_0 = arith.constant 0 : i32
    return %c0_i32, %arg2 : i32, i32
  }
  func.func @transform_5(%arg0: i32, %arg1: i32, %arg2: i32) -> (i32, i32) {
    %c0_i32 = arith.constant 0 : i32
    %c0_i32_0 = arith.constant 0 : i32
    return %c0_i32, %arg2 : i32, i32
  }
  func.func @transform_6(%arg0: i32, %arg1: i32, %arg2: i32) -> (i32, i32, i32) {
    %c0_i32 = arith.constant 0 : i32
    return %arg0, %arg1, %arg2 : i32, i32, i32
  }
}

</mosaic_0001>

<llo_original>
// kernel: tpu_custom_call.1
$region0: #{tpu_custom_call.1}
  #allocation0 [shape = 'u32[]', space=smem, size = 0x4, offset = 0x4, fixed_abs, tag = 'smem constant byte address 0x4 - core index']
  #allocation1 [shape = 'u32[144,128]{1,0:T(1,128)}', space=vmem, size = 0x12000, scoped, tag = 'internal scratch']
  %s0 = inlined_call_operand.hbm [shape: f32[1,16,128], index: 0, kind: input, shape index: {}]
  %s1 = inlined_call_operand.hbm [shape: f32[1,16,128], index: 1, kind: input, shape index: {}]
  %s2 = inlined_call_operand.hbm [shape: f32[1,128], index: 2, kind: input, shape index: {}]
  %s3 = inlined_call_operand.hbm [shape: f32[1,128], index: 3, kind: input, shape index: {}]
  %s4 = inlined_call_operand.hbm [shape: bf16[128,128], index: 4, kind: input, shape index: {}]
  %s5 = inlined_call_operand.hbm [shape: f32[1,128], index: 5, kind: input, shape index: {}]
  %s6 = inlined_call_operand.hbm [shape: f32[1,16,128], index: 6, kind: output, shape index: {}]
  %s7 = sld [smem:[#allocation0]]
  $region58: #{tpu_custom_call.1} parent=0
    _
  %s9 = ssub.s32 1, %s7
  %s10 = scalar_select 0, %s9, %s7
  $region1: #{tpu_custom_call.1} parent=0
    #allocation2 [shape = 'u8[8192]{0}', space=vmem, size = 0x2000, scoped, tag = 'input window, operand 0, single buffered']
    #allocation3 [shape = 's32[1]{0}', space=sflag, size = 0x4, scoped, tag = 'scoped memory for tpu_custom_call.1']
    #allocation4 [shape = 's32[1]{0}', space=sflag, size = 0x4, scoped, tag = 'scoped memory for tpu_custom_call.1']
    #allocation5 [shape = 'u8[8192]{0}', space=vmem, size = 0x2000, scoped, tag = 'input window, operand 1, single buffered']
    #allocation6 [shape = 's32[1]{0}', space=sflag, size = 0x4, scoped, tag = 'scoped memory for tpu_custom_call.1']
    #allocation7 [shape = 'u8[512]{0}', space=vmem, size = 0x400, scoped, tag = 'input window, operand 2, single buffered']
    #allocation8 [shape = 'u8[512]{0}', space=vmem, size = 0x400, scoped, tag = 'input window, operand 3, single buffered']
    #allocation9 [shape = 's32[1]{0}', space=sflag, size = 0x4, scoped, tag = 'scoped memory for tpu_custom_call.1']
    #allocation10 [shape = 'u8[32768]{0}', space=vmem, size = 0x8000, scoped, tag = 'input window, operand 4, single buffered']
    #allocation11 [shape = 'u8[512]{0}', space=vmem, size = 0x400, scoped, tag = 'input window, operand 5, single buffered']
    #allocation12 [shape = 's32[1]{0}', space=sflag, size = 0x4, scoped, tag = 'scoped memory for tpu_custom_call.1']
    #allocation13 [shape = 'u8[8192]{0}', space=vmem, size = 0x2000, scoped, tag = 'output window, operand 0, single buffered']
    %11 = vsyncpa [#allocation3], 0
    %12 = vsyncpa [#allocation6], 0
    %13 = vsyncpa [#allocation9], 0
    %14 = vsyncpa [#allocation12], 0
    %15 = vsyncpa [#allocation4], 0
    // Predicated region
    $region2: #{tpu_custom_call.1} parent=1 // pred_check
      _
    $region3: #{tpu_custom_call.1} parent=1 // pred_check_branch
      %17 = sbr.rel (0) target = $region5
    $region4: #{tpu_custom_call.1} parent=1 // pred_region
      %s19 = ssub.s32 256, 256
      %20 = vsyncadd [#allocation3], %s19
      %s21 = sshll.u32 [#allocation2], 4
      %s22 = int_to_ptr.vmem [resolvable:$true] %s21
      %27 = dma.hbm_to_vmem [thread:$0]  %s0, 256, %s22, [#allocation3], 128, 128, 8
    $region5: #{tpu_custom_call.1} parent=1 // pred_fallthru
      _
    // Predicated region
    $region6: #{tpu_custom_call.1} parent=1 // pred_check
      _
    $region7: #{tpu_custom_call.1} parent=1 // pred_check_branch
      %29 = sbr.rel (0) target = $region9
    $region8: #{tpu_custom_call.1} parent=1 // pred_region
      %s31 = ssub.s32 256, 256
      %32 = vsyncadd [#allocation6], %s31
      %s33 = sshll.u32 [#allocation5], 4
      %s34 = int_to_ptr.vmem [resolvable:$true] %s33
      %39 = dma.hbm_to_vmem [thread:$0]  %s1, 256, %s34, [#allocation6], 128, 128, 8
    $region9: #{tpu_custom_call.1} parent=1 // pred_fallthru
      _
    // Predicated region
    $region10: #{tpu_custom_call.1} parent=1 // pred_check
      _
    $region11: #{tpu_custom_call.1} parent=1 // pred_check_branch
      %41 = sbr.rel (0) target = $region13
    $region12: #{tpu_custom_call.1} parent=1 // pred_region
      %s43 = ssub.s32 16, 16
      %44 = vsyncadd [#allocation6], %s43
      %s46 = sshll.u32 [#allocation7], 4
      %s47 = int_to_ptr.vmem [resolvable:$true] %s46
      %49 = dma.hbm_to_vmem [thread:$0]  %s2, 16, %s47, [#allocation6]
    $region13: #{tpu_custom_call.1} parent=1 // pred_fallthru
      _
    // Predicated region
    $region14: #{tpu_custom_call.1} parent=1 // pred_check
      _
    $region15: #{tpu_custom_call.1} parent=1 // pred_check_branch
      %51 = sbr.rel (0) target = $region17
    $region16: #{tpu_custom_call.1} parent=1 // pred_region
      %s53 = ssub.s32 16, 16
      %54 = vsyncadd [#allocation9], %s53
      %s56 = sshll.u32 [#allocation8], 4
      %s57 = int_to_ptr.vmem [resolvable:$true] %s56
      %59 = dma.hbm_to_vmem [thread:$0]  %s3, 16, %s57, [#allocation9]
    $region17: #{tpu_custom_call.1} parent=1 // pred_fallthru
      _
    // Predicated region
    $region18: #{tpu_custom_call.1} parent=1 // pred_check
      _
    $region19: #{tpu_custom_call.1} parent=1 // pred_check_branch
      %61 = sbr.rel (0) target = $region21
    $region20: #{tpu_custom_call.1} parent=1 // pred_region
      %s63 = ssub.s32 1024, 1024
      %64 = vsyncadd [#allocation9], %s63
      %s65 = sshll.u32 [#allocation10], 4
      %s66 = int_to_ptr.vmem [resolvable:$true] %s65
      %71 = dma.hbm_to_vmem [thread:$0]  %s4, 1024, %s66, [#allocation9], 64, 64, 4
    $region21: #{tpu_custom_call.1} parent=1 // pred_fallthru
      _
    // Predicated region
    $region22: #{tpu_custom_call.1} parent=1 // pred_check
      _
    $region23: #{tpu_custom_call.1} parent=1 // pred_check_branch
      %73 = sbr.rel (0) target = $region25
    $region24: #{tpu_custom_call.1} parent=1 // pred_region
      %s75 = ssub.s32 16, 16
      %76 = vsyncadd [#allocation12], %s75
      %s78 = sshll.u32 [#allocation11], 4
      %s79 = int_to_ptr.vmem [resolvable:$true] %s78
      %81 = dma.hbm_to_vmem [thread:$0]  %s5, 16, %s79, [#allocation12]
    $region25: #{tpu_custom_call.1} parent=1 // pred_fallthru
      _
    // Predicated region
    $region26: #{tpu_custom_call.1} parent=1 // pred_check
      _
    $region27: #{tpu_custom_call.1} parent=1 // pred_check_branch
      %83 = sbr.rel (0) target = $region29
    $region28: #{tpu_custom_call.1} parent=1 // pred_region
      %84 = dma.done [#allocation3], 256
    $region29: #{tpu_custom_call.1} parent=1 // pred_fallthru
      _
    // Predicated region
    $region30: #{tpu_custom_call.1} parent=1 // pred_check
      _
    $region31: #{tpu_custom_call.1} parent=1 // pred_check_branch
      %86 = sbr.rel (0) target = $region33
    $region32: #{tpu_custom_call.1} parent=1 // pred_region
      %87 = dma.done [#allocation6], 256
    $region33: #{tpu_custom_call.1} parent=1 // pred_fallthru
      _
    // Predicated region
    $region34: #{tpu_custom_call.1} parent=1 // pred_check
      _
    $region35: #{tpu_custom_call.1} parent=1 // pred_check_branch
      %89 = sbr.rel (0) target = $region37
    $region36: #{tpu_custom_call.1} parent=1 // pred_region
      %90 = dma.done [#allocation6], 16
    $region37: #{tpu_custom_call.1} parent=1 // pred_fallthru
      _
    // Predicated region
    $region38: #{tpu_custom_call.1} parent=1 // pred_check
      _
    $region39: #{tpu_custom_call.1} parent=1 // pred_check_branch
      %92 = sbr.rel (0) target = $region41
    $region40: #{tpu_custom_call.1} parent=1 // pred_region
      %93 = dma.done [#allocation9], 16
    $region41: #{tpu_custom_call.1} parent=1 // pred_fallthru
      _
    // Predicated region
    $region42: #{tpu_custom_call.1} parent=1 // pred_check
      _
    $region43: #{tpu_custom_call.1} parent=1 // pred_check_branch
      %95 = sbr.rel (0) target = $region45
    $region44: #{tpu_custom_call.1} parent=1 // pred_region
      %96 = dma.done [#allocation9], 1024
    $region45: #{tpu_custom_call.1} parent=1 // pred_fallthru
      _
    // Predicated region
    $region46: #{tpu_custom_call.1} parent=1 // pred_check
      _
    $region47: #{tpu_custom_call.1} parent=1 // pred_check_branch
      %98 = sbr.rel (0) target = $region49
    $region48: #{tpu_custom_call.1} parent=1 // pred_region
      %99 = dma.done [#allocation12], 16
    $region49: #{tpu_custom_call.1} parent=1 // pred_fallthru
      _
    %v101 = vld [vmem:[#allocation2] sm:$0xff]
    %v102 = vld [vmem:[#allocation2 + $0x8] sm:$0xff]
    %103 = vadd.xlane.f32.xlu0 %v101
    %v104 = vpop.xlane.xlu0 %103
    %105 = vadd.xlane.f32.xlu0 %v102
    %v106 = vpop.xlane.xlu0 %105
    %v107 = vmul.f32 %v101, %v101
    %v108 = vmul.f32 %v102, %v102
    %109 = vadd.xlane.f32.xlu0 %v107
    %v110 = vpop.xlane.xlu0 %109
    %111 = vadd.xlane.f32.xlu0 %v108
    %v112 = vpop.xlane.xlu0 %111
    %v113 = vmul.f32 %v104, 0.03125
    %v114 = vmul.f32 %v106, 0.03125
    %v115 = vmul.f32 %v110, 0.03125
    %v116 = vmul.f32 %v112, 0.03125
    %v117 = vmul.f32 %v113, %v113
    %v118 = vmul.f32 %v114, %v114
    %v119 = vsub.f32 %v115, %v117
    %v120 = vsub.f32 %v116, %v118
    %v121 = vmax.f32 %v119, 0.0
    %v122 = vmax.f32 %v120, 0.0
    %v123 = vadd.f32 %v121, 1e-06
    %v124 = vadd.f32 %v122, 1e-06
    %v125 = vrsqrt.pop %v123
    %v126 = vrsqrt.pop %v124
    %v127 = vsub.f32 %v101, %v113
    %v128 = vsub.f32 %v102, %v114
    %v129 = vmul.f32 %v127, %v125
    %v130 = vmul.f32 %v128, %v126
    %v131 = vld [vmem:[#allocation7] sm:$0x1]
    %v133 = vlaneseq
    %v134 = vshrl.u32 %v133, 7
    %v135 = vsub.s32 0, %v134
    %v136 = vrot.slane %v131, %v135
    %v138 = vmul.f32 %v129, %v136
    %v139 = vmul.f32 %v130, %v136
    %v140 = vld [vmem:[#allocation8] sm:$0x1]
    %v142 = vlaneseq
    %v143 = vshrl.u32 %v142, 7
    %v144 = vsub.s32 0, %v143
    %v145 = vrot.slane %v140, %v144
    %v147 = vadd.f32 %v138, %v145
    %v148 = vadd.f32 %v139, %v145
    %v149 = vpack.c.bf16 %v148, %v147
    %v150 = vld [vmem:[#allocation10] sm:$0xf]
    %v151 = vld [vmem:[#allocation10 + $0x4] sm:$0xf]
    %v152 = vld [vmem:[#allocation10 + $0x8] sm:$0xf]
    %v153 = vld [vmem:[#allocation10 + $0xc] sm:$0xf]
    %v154 = vld [vmem:[#allocation10 + $0x10] sm:$0xf]
    %v155 = vld [vmem:[#allocation10 + $0x14] sm:$0xf]
    %v156 = vld [vmem:[#allocation10 + $0x18] sm:$0xf]
    %v157 = vld [vmem:[#allocation10 + $0x1c] sm:$0xf]
    %v158 = vld [vmem:[#allocation10 + $0x20] sm:$0xf]
    %v159 = vld [vmem:[#allocation10 + $0x24] sm:$0xf]
    %v160 = vld [vmem:[#allocation10 + $0x28] sm:$0xf]
    %v161 = vld [vmem:[#allocation10 + $0x2c] sm:$0xf]
    %v162 = vld [vmem:[#allocation10 + $0x30] sm:$0xf]
    %v163 = vld [vmem:[#allocation10 + $0x34] sm:$0xf]
    %v164 = vld [vmem:[#allocation10 + $0x38] sm:$0xf]
    %v165 = vld [vmem:[#allocation10 + $0x3c] sm:$0xf]
    %v166 = vld [vmem:[#allocation11] sm:$0x1]
    %v168 = vlaneseq
    %v169 = vshrl.u32 %v168, 7
    %v170 = vsub.s32 0, %v169
    %v171 = vrot.slane %v166, %v170
    %v189 = vunpack.c.l.b16 %v150
    %v190 = vunpack.c.l.b16 %v151
    %v191 = vunpack.c.l.b16 %v152
    %v192 = vunpack.c.l.b16 %v153
    %v193 = vunpack.c.l.b16 %v154
    %v194 = vunpack.c.l.b16 %v155
    %v195 = vunpack.c.l.b16 %v156
    %v196 = vunpack.c.l.b16 %v157
    %v197 = vunpack.c.l.b16 %v158
    %v198 = vunpack.c.l.b16 %v159
    %v199 = vunpack.c.l.b16 %v160
    %v200 = vunpack.c.l.b16 %v161
    %v201 = vunpack.c.l.b16 %v162
    %v202 = vunpack.c.l.b16 %v163
    %v203 = vunpack.c.l.b16 %v164
    %v204 = vunpack.c.l.b16 %v165
    %v205 = vpack.c.b16 %v190, %v189
    %v206 = vpack.c.b16 %v192, %v191
    %v207 = vpack.c.b16 %v194, %v193
    %v208 = vpack.c.b16 %v196, %v195
    %v209 = vpack.c.b16 %v198, %v197
    %v210 = vpack.c.b16 %v200, %v199
    %v211 = vpack.c.b16 %v202, %v201
    %v212 = vpack.c.b16 %v204, %v203
    %221 = vmatprep.subr.bf16.mxu0 0
    %222 = vmatpush1.bf16.msra.mxu0 %v205
    %223 = vmatprep.subr.bf16.mxu0 0
    %224 = vmatpush1.bf16.msra.mxu0 %v206
    %225 = vmatprep.subr.bf16.mxu0 0
    %226 = vmatpush1.bf16.msra.mxu0 %v207
    %227 = vmatprep.subr.bf16.mxu0 0
    %228 = vmatpush1.bf16.msra.mxu0 %v208
    %229 = vmatprep.subr.bf16.mxu0 0
    %230 = vmatpush1.bf16.msra.mxu0 %v209
    %231 = vmatprep.subr.bf16.mxu0 0
    %232 = vmatpush1.bf16.msra.mxu0 %v210
    %233 = vmatprep.subr.bf16.mxu0 0
    %234 = vmatpush1.bf16.msra.mxu0 %v211
    %235 = vmatprep.subr.bf16.mxu0 0
    %236 = vmatpush1.bf16.msra.mxu0 %v212
    %237 = vmatprep.subr.bf16.mxu0 0
    %238 = vmatpush1.bf16.msra.mxu0 0
    %239 = vmatprep.subr.bf16.mxu0 0
    %240 = vmatpush1.bf16.msra.mxu0 0
    %241 = vmatprep.subr.bf16.mxu0 0
    %242 = vmatpush1.bf16.msra.mxu0 0
    %243 = vmatprep.subr.bf16.mxu0 0
    %244 = vmatpush1.bf16.msra.mxu0 0
    %245 = vmatprep.subr.bf16.mxu0 0
    %246 = vmatpush1.bf16.msra.mxu0 0
    %247 = vmatprep.subr.bf16.mxu0 0
    %248 = vmatpush1.bf16.msra.mxu0 0
    %249 = vmatprep.subr.bf16.mxu0 0
    %250 = vmatpush1.bf16.msra.mxu0 0
    %251 = vmatprep.subr.bf16.mxu0 0
    %252 = vmatpush1.bf16.msra.mxu0 0
    %253 = vmatprep.mubr.bf16.mxu0 0
    %254 = vmatmul.mubr.bf16.gmra.mrb[0].mxu0 %v149
    %v255 = vpop.f32.mrb[0].mxu0
    %v256 = vadd.f32 %v171, %v255
    %v257 = vpop.f32.mrb[0].mxu0
    %v258 = vpop.f32.mrb[0].mxu0
    %v259 = vadd.f32 %v171, %v258
    %v260 = vpop.f32.mrb[0].mxu0
    %261 = vdwg.mxu0
    %v262 = vld [vmem:[#allocation5] sm:$0xff]
    %v263 = vld [vmem:[#allocation5 + $0x8] sm:$0xff]
    %v264 = vadd.f32 %v262, %v256
    %v265 = vadd.f32 %v263, %v259
    %266 = vst [vmem:[#allocation13] sm:$0xff] %v264
    %267 = vst [vmem:[#allocation13 + $0x8] sm:$0xff] %v265
    // Predicated region
    $region50: #{tpu_custom_call.1} parent=1 // pred_check
      _
    $region51: #{tpu_custom_call.1} parent=1 // pred_check_branch
      %269 = sbr.rel (0) target = $region53
    $region52: #{tpu_custom_call.1} parent=1 // pred_region
      %s271 = ssub.s32 256, 256
      %272 = vsyncadd [#allocation4], %s271
      %s273 = sshll.u32 [#allocation13], 4
      %s274 = int_to_ptr.vmem [resolvable:$true] %s273
      %279 = dma.vmem_to_hbm [thread:$0]  %s274, 256, %s6, [#allocation4], 128, 128, 8
    $region53: #{tpu_custom_call.1} parent=1 // pred_fallthru
      _
    // Predicated region
    $region54: #{tpu_custom_call.1} parent=1 // pred_check
      _
    $region55: #{tpu_custom_call.1} parent=1 // pred_check_branch
      %281 = sbr.rel (0) target = $region57
    $region56: #{tpu_custom_call.1} parent=1 // pred_region
      %282 = dma.done [#allocation4], 256
    $region57: #{tpu_custom_call.1} parent=1 // pred_fallthru
      _
    %283 = vsyncpa [#allocation3], 1
    %284 = vsyncpa [#allocation6], 1
    %285 = vsyncpa [#allocation9], 1
    %286 = vsyncpa [#allocation12], 1
    %287 = vsyncpa [#allocation4], 1

</llo_original>
